<compile_context>
chip_gen: v5e
topology: v5e:2x2
jax: 0.10.0
libtpu: 0.0.40
codegen_flags: <defaults>
</compile_context>

<pallas_src>
import functools

import jax
import jax.numpy as jnp
from jax import lax
from jax.experimental import pallas as pl
from jax.experimental.pallas import tpu as pltpu

_MIB = 2 ** 20


def _round_up(x, m):
    return ((x + m - 1) // m) * m


def _vmem_capacity_bytes():
    """Physical VMEM per TensorCore (128 MiB v5e/v6e, 64 MiB v7x)."""
    try:
        return int(pltpu.get_tpu_info().vmem_capacity_bytes)
    except Exception:
        return 64 * _MIB  # conservative fallback (v7x per-TC)


def _row_tile(n_pad, f_pad, target_bytes=4 * _MIB):
    """Largest power-of-two row tile whose f32 output block is ~target_bytes."""
    cap = max(8, target_bytes // (4 * f_pad))
    t = 8
    while t * 2 <= cap:
        t *= 2
    t = min(t, n_pad)
    while n_pad % t:
        t //= 2
    return max(t, 8)


# ----------------------------------------------------------------------------
# Kernel 1: fused PageRank power iteration (whole while-loop on-chip).
#   pi_{k+1} = (1 - alpha) * (pi_k @ M^T) + alpha / N
#   stop when ||pi_{k+1} - pi_k||_2 <= eps_thresh   (checked every K steps,
#   on the squared residual), or after max_iters iterations.
#   pi is carried as an (8, Np) sublane-replicated, lane-dense tile.
# ----------------------------------------------------------------------------
def _pagerank_power_kernel(pi0_ref, a_ref, pi_ref, *, alpha, n_nodes,
                           eps_thresh, max_iters, check_every):
    one_m_alpha = jnp.float32(1.0 - alpha)
    damp = jnp.float32(alpha / n_nodes)  # uniform teleport term, as in the reference
    # diff has 8 identical replicated rows -> squared residual is 8x the true one.
    thresh_sq = jnp.float32(8.0 * eps_thresh * eps_thresh)

    def one_step(pi):
        # (8, Np) @ (Np, Np) on the MXU, f32 accumulation.  Only the MXU operand
        # is cast (no-op when A is already f32); elementwise math stays f32.
        prop = jnp.dot(pi.astype(a_ref.dtype), a_ref[...],
                       preferred_element_type=jnp.float32)
        return one_m_alpha * prop + damp

    def block(carry):
        pi, _eps_sq, it = carry
        # check_every-1 unrolled matvecs, then one more for the residual check.
        pi_mid = lax.fori_loop(0, check_every - 1, lambda _, p: one_step(p),
                               pi, unroll=True)
        pi_new = one_step(pi_mid)
        diff = pi_new - pi_mid
        eps_sq = jnp.sum(diff * diff)  # squared L2, no sqrt
        return pi_new, eps_sq, it + jnp.int32(check_every)

    def cond(carry):
        _pi, eps_sq, it = carry
        return jnp.logical_and(eps_sq > thresh_sq, it < max_iters)

    init = (pi0_ref[...], jnp.float32(1e30), jnp.int32(0))
    pi_final, _, _ = lax.while_loop(cond, block, init)

    # Mask only the final store so padded lanes of the returned pi are exact 0
    # (inside the loop they sit harmlessly at alpha/N and never feed back).
    n_pad = pi_ref.shape[1]
    lane = lax.broadcasted_iota(jnp.int32, (1, n_pad), 1)
    mask = (lane < n_nodes).astype(jnp.float32)
    pi_ref[...] = pi_final[0:1, :] * mask


def pagerank_power(pi0_rep, a_mat, *, alpha, n_nodes, eps_thresh,
                   max_iters, check_every):
    assert check_every >= 2, "check_every>=2 keeps the residual exact over real nodes"
    n_pad = a_mat.shape[0]
    kernel = functools.partial(
        _pagerank_power_kernel, alpha=float(alpha), n_nodes=int(n_nodes),
        eps_thresh=float(eps_thresh), max_iters=int(max_iters),
        check_every=int(check_every))
    vmem = pl.BlockSpec(memory_space=pltpu.MemorySpace.VMEM)
    a_bytes = int(n_pad) * int(n_pad) * a_mat.dtype.itemsize
    # Generation-aware scoped-VMEM limit: enough for the resident matrix plus
    # pi buffers and slack, capped 8 MiB below this generation's physical VMEM.
    cap = _vmem_capacity_bytes()
    need = a_bytes + (8 + 8 + 1) * n_pad * 4 + 2 * _MIB
    vmem_limit = int(max(32 * _MIB, min(cap - 8 * _MIB, need)))
    return pl.pallas_call(
        kernel,
        out_shape=jax.ShapeDtypeStruct((1, n_pad), jnp.float32),
        in_specs=[vmem, vmem],
        out_specs=vmem,
        compiler_params=pltpu.CompilerParams(vmem_limit_bytes=vmem_limit),
        cost_estimate=pl.CostEstimate(
            flops=2 * 8 * n_pad * n_pad * int(max_iters),
            transcendentals=0,
            bytes_accessed=a_bytes + (8 + 1) * 4 * n_pad),
    )(pi0_rep, a_mat)


# ----------------------------------------------------------------------------
# Kernel 2: diffusion of node features by the PageRank scores.
#   out = pi * col_sum   (rank-1 broadcast; col_sum precomputed once in glue)
#   Row-tiled over N with a "parallel" grid axis; ~4 MiB output blocks.
# ----------------------------------------------------------------------------
def _diffusion_kernel(pi_ref, colsum_ref, out_ref):
    out_ref[...] = (pi_ref[...] * colsum_ref[...]).astype(out_ref.dtype)


def pagerank_diffuse(pi_col, col_sum):
    n_pad = pi_col.shape[0]
    f_pad = col_sum.shape[1]
    tn = _row_tile(n_pad, f_pad)
    return pl.pallas_call(
        _diffusion_kernel,
        out_shape=jax.ShapeDtypeStruct((n_pad, f_pad), jnp.float32),
        grid=(n_pad // tn,),
        in_specs=[pl.BlockSpec((tn, 1), lambda i: (i, 0)),
                  pl.BlockSpec((1, f_pad), lambda i: (0, 0))],
        out_specs=pl.BlockSpec((tn, f_pad), lambda i: (i, 0)),
        compiler_params=pltpu.CompilerParams(
            dimension_semantics=("parallel",)),
        cost_estimate=pl.CostEstimate(
            flops=n_pad * f_pad, transcendentals=0,
            bytes_accessed=4 * (n_pad + f_pad + n_pad * f_pad)),
    )(pi_col, col_sum)


# ----------------------------------------------------------------------------
# Module-equivalent forward (PageRankDiffusion.forward)
# ----------------------------------------------------------------------------
def page_rank_diffusion(x, edge_index, key, *, alpha=0.1, eps_thresh=1e-5,
                        add_self_loops=True, max_iters=1024, check_every=8,
                        a_dtype=None):
    n, f = x.shape
    n_pad = _round_up(n, 128)
    f_pad = _round_up(f, 128)

    # Pick the resident-matrix dtype by what fits this generation's VMEM:
    # f32 when possible (eps_thresh=1e-5 is then reachable), bf16 otherwise with
    # a bf16-consistent residual floor so the loop can actually terminate.
    usable = _vmem_capacity_bytes() - 12 * _MIB
    if a_dtype is None:
        a_dtype = jnp.float32 if n_pad * n_pad * 4 <= usable else jnp.bfloat16
    eps_used = float(eps_thresh)
    if jnp.dtype(a_dtype) == jnp.dtype(jnp.bfloat16):
        eps_used = max(eps_used, 3e-4)

    # --- glue: padded, normalized row-form propagation matrix in one pass ----
    # GCNPropagate('sym'): out = M pi with M[c, r] = d_c^-1/2 d_r^-1/2 A[r, c],
    # d = in-degree incl. fresh self-loops (gcn_norm remove-then-re-add).
    # Row-vector form multiplies by M^T = D^-1/2 A D^-1/2 (== A_hat when the
    # graph is undirected); padded rows/cols stay exactly 0.
    a = jnp.zeros((n_pad, n_pad), jnp.float32)
    a = a.at[edge_index[0], edge_index[1]].set(1.0)
    if add_self_loops:
        idx = jnp.arange(n)
        a = a.at[idx, idx].set(1.0)
    deg = jnp.sum(a, axis=0)                       # in-degree; padded cols -> 0
    dinv = jnp.where(deg > 0.0, lax.rsqrt(jnp.maximum(deg, 1e-30)), 0.0)
    m_row = (dinv[:, None] * a * dinv[None, :]).astype(a_dtype)

    # --- pi init: rand((N,1)) / ||.||_1, lane-dense, sublane-replicated x8 ----
    pi0 = jax.random.uniform(key, (n, 1), jnp.float32)
    pi0 = pi0 / jnp.sum(jnp.abs(pi0))
    pi0_row = jnp.zeros((1, n_pad), jnp.float32).at[0, :n].set(pi0[:, 0])
    pi0_rep = jnp.tile(pi0_row, (8, 1))

    # --- fused on-chip power iteration ---------------------------------------
    pi_row = pagerank_power(pi0_rep, m_row, alpha=alpha, n_nodes=n,
                            eps_thresh=eps_used, max_iters=max_iters,
                            check_every=check_every)

    # --- diffusion: out = pi * x.sum(0, keepdims=True) ------------------------
    col_sum = jnp.sum(x.astype(jnp.float32), axis=0, keepdims=True)   # (1, F)
    col_sum = jnp.zeros((1, f_pad), jnp.float32).at[:, :f].set(col_sum)
    pi_col = pi_row.reshape(n_pad, 1)
    out = pagerank_diffuse(pi_col, col_sum)
    return out[:n, :f]


if __name__ == "__main__":
    N, F = 16, 32

    # Deterministic small undirected graph: ring + chord edges (both directions).
    src, dst = [], []
    for i in range(N):
        for j in ((i + 1) % N, (i + 5) % N):
            src += [i, j]
            dst += [j, i]
    edge_index = jnp.array([src, dst], dtype=jnp.int32)   # (2, 64)

    key = jax.random.PRNGKey(0)
    kx, kpi = jax.random.split(key)
    x = jax.random.normal(kx, (N, F), dtype=jnp.float32)

    out = page_rank_diffusion(x, edge_index, kpi, alpha=0.1, eps_thresh=1e-5)
    out = jax.block_until_ready(out)
    assert out.shape == (N, F) and out.dtype == jnp.float32
    assert bool(jnp.all(jnp.isfinite(out)))
    print("KERNEL_OK")
</pallas_src>

<mosaic_0001>
module attributes {stable_mosaic.version = 11 : i64} {
  func.func @_pagerank_power_kernel(%arg0: memref<8x128xf32, #tpu.memory_space<vmem>>, %arg1: memref<128x128xf32, #tpu.memory_space<vmem>>, %arg2: memref<1x128xf32, #tpu.memory_space<vmem>>) attributes {dimension_semantics = [], scalar_prefetch = 0 : i64, scratch_operands = 0 : i64, tpu.core_type = #tpu.core_type<tc>} {
    %c0 = arith.constant 0 : index
    %c0_0 = arith.constant 0 : index
    %0 = vector.load %arg0[%c0, %c0_0] : memref<8x128xf32, #tpu.memory_space<vmem>>, vector<8x128xf32>
    %cst = arith.constant 8.000000e-10 : f32
    %cst_1 = arith.constant 0.899999976 : f32
    %cst_2 = arith.constant 6.250000e-03 : f32
    %cst_3 = arith.constant 1.000000e+30 : f32
    %c0_i32 = arith.constant 0 : i32
    %1:3 = scf.while (%arg3 = %0, %arg4 = %cst_3, %arg5 = %c0_i32) : (vector<8x128xf32>, f32, i32) -> (vector<8x128xf32>, f32, i32) {
      %10 = arith.cmpf ogt, %arg4, %cst : f32
      %c1024_i32 = arith.constant 1024 : i32
      %11 = arith.cmpi slt, %arg5, %c1024_i32 : i32
      %12 = arith.andi %10, %11 : i1
      scf.condition(%12) %arg3, %arg4, %arg5 : vector<8x128xf32>, f32, i32
    } do {
    ^bb0(%arg3: vector<8x128xf32>, %arg4: f32, %arg5: i32):
      %c0_i32_6 = arith.constant 0 : i32
      %c0_7 = arith.constant 0 : index
      %c0_8 = arith.constant 0 : index
      %10 = vector.load %arg1[%c0_7, %c0_8] : memref<128x128xf32, #tpu.memory_space<vmem>>, vector<128x128xf32>
      %cst_9 = arith.constant dense<0.000000e+00> : vector<8x128xf32>
      %11 = tpu.matmul %arg3, %10, %cst_9 {dimension_numbers = #tpu.dot_dimension_numbers<[1], [0], [0], [1], [0, 0, 1, 1], [], []>} : vector<8x128xf32>, vector<128x128xf32>, vector<8x128xf32> -> vector<8x128xf32>
      %12 = vector.broadcast %cst_1 : f32 to vector<8x128xf32>
      %13 = arith.mulf %12, %11 : vector<8x128xf32>
      %14 = vector.broadcast %cst_2 : f32 to vector<8x128xf32>
      %15 = arith.addf %13, %14 : vector<8x128xf32>
      %c1_i32 = arith.constant 1 : i32
      %c0_10 = arith.constant 0 : index
      %c0_11 = arith.constant 0 : index
      %16 = vector.load %arg1[%c0_10, %c0_11] : memref<128x128xf32, #tpu.memory_space<vmem>>, vector<128x128xf32>
      %cst_12 = arith.constant dense<0.000000e+00> : vector<8x128xf32>
      %17 = tpu.matmul %15, %16, %cst_12 {dimension_numbers = #tpu.dot_dimension_numbers<[1], [0], [0], [1], [0, 0, 1, 1], [], []>} : vector<8x128xf32>, vector<128x128xf32>, vector<8x128xf32> -> vector<8x128xf32>
      %18 = vector.broadcast %cst_1 : f32 to vector<8x128xf32>
      %19 = arith.mulf %18, %17 : vector<8x128xf32>
      %20 = vector.broadcast %cst_2 : f32 to vector<8x128xf32>
      %21 = arith.addf %19, %20 : vector<8x128xf32>
      %c2_i32 = arith.constant 2 : i32
      %c0_13 = arith.constant 0 : index
      %c0_14 = arith.constant 0 : index
      %22 = vector.load %arg1[%c0_13, %c0_14] : memref<128x128xf32, #tpu.memory_space<vmem>>, vector<128x128xf32>
      %cst_15 = arith.constant dense<0.000000e+00> : vector<8x128xf32>
      %23 = tpu.matmul %21, %22, %cst_15 {dimension_numbers = #tpu.dot_dimension_numbers<[1], [0], [0], [1], [0, 0, 1, 1], [], []>} : vector<8x128xf32>, vector<128x128xf32>, vector<8x128xf32> -> vector<8x128xf32>
      %24 = vector.broadcast %cst_1 : f32 to vector<8x128xf32>
      %25 = arith.mulf %24, %23 : vector<8x128xf32>
      %26 = vector.broadcast %cst_2 : f32 to vector<8x128xf32>
      %27 = arith.addf %25, %26 : vector<8x128xf32>
      %c3_i32 = arith.constant 3 : i32
      %c0_16 = arith.constant 0 : index
      %c0_17 = arith.constant 0 : index
      %28 = vector.load %arg1[%c0_16, %c0_17] : memref<128x128xf32, #tpu.memory_space<vmem>>, vector<128x128xf32>
      %cst_18 = arith.constant dense<0.000000e+00> : vector<8x128xf32>
      %29 = tpu.matmul %27, %28, %cst_18 {dimension_numbers = #tpu.dot_dimension_numbers<[1], [0], [0], [1], [0, 0, 1, 1], [], []>} : vector<8x128xf32>, vector<128x128xf32>, vector<8x128xf32> -> vector<8x128xf32>
      %30 = vector.broadcast %cst_1 : f32 to vector<8x128xf32>
      %31 = arith.mulf %30, %29 : vector<8x128xf32>
      %32 = vector.broadcast %cst_2 : f32 to vector<8x128xf32>
      %33 = arith.addf %31, %32 : vector<8x128xf32>
      %c4_i32 = arith.constant 4 : i32
      %c0_19 = arith.constant 0 : index
      %c0_20 = arith.constant 0 : index
      %34 = vector.load %arg1[%c0_19, %c0_20] : memref<128x128xf32, #tpu.memory_space<vmem>>, vector<128x128xf32>
      %cst_21 = arith.constant dense<0.000000e+00> : vector<8x128xf32>
      %35 = tpu.matmul %33, %34, %cst_21 {dimension_numbers = #tpu.dot_dimension_numbers<[1], [0], [0], [1], [0, 0, 1, 1], [], []>} : vector<8x128xf32>, vector<128x128xf32>, vector<8x128xf32> -> vector<8x128xf32>
      %36 = vector.broadcast %cst_1 : f32 to vector<8x128xf32>
      %37 = arith.mulf %36, %35 : vector<8x128xf32>
      %38 = vector.broadcast %cst_2 : f32 to vector<8x128xf32>
      %39 = arith.addf %37, %38 : vector<8x128xf32>
      %c5_i32 = arith.constant 5 : i32
      %c0_22 = arith.constant 0 : index
      %c0_23 = arith.constant 0 : index
      %40 = vector.load %arg1[%c0_22, %c0_23] : memref<128x128xf32, #tpu.memory_space<vmem>>, vector<128x128xf32>
      %cst_24 = arith.constant dense<0.000000e+00> : vector<8x128xf32>
      %41 = tpu.matmul %39, %40, %cst_24 {dimension_numbers = #tpu.dot_dimension_numbers<[1], [0], [0], [1], [0, 0, 1, 1], [], []>} : vector<8x128xf32>, vector<128x128xf32>, vector<8x128xf32> -> vector<8x128xf32>
      %42 = vector.broadcast %cst_1 : f32 to vector<8x128xf32>
      %43 = arith.mulf %42, %41 : vector<8x128xf32>
      %44 = vector.broadcast %cst_2 : f32 to vector<8x128xf32>
      %45 = arith.addf %43, %44 : vector<8x128xf32>
      %c6_i32 = arith.constant 6 : i32
      %c0_25 = arith.constant 0 : index
      %c0_26 = arith.constant 0 : index
      %46 = vector.load %arg1[%c0_25, %c0_26] : memref<128x128xf32, #tpu.memory_space<vmem>>, vector<128x128xf32>
      %cst_27 = arith.constant dense<0.000000e+00> : vector<8x128xf32>
      %47 = tpu.matmul %45, %46, %cst_27 {dimension_numbers = #tpu.dot_dimension_numbers<[1], [0], [0], [1], [0, 0, 1, 1], [], []>} : vector<8x128xf32>, vector<128x128xf32>, vector<8x128xf32> -> vector<8x128xf32>
      %48 = vector.broadcast %cst_1 : f32 to vector<8x128xf32>
      %49 = arith.mulf %48, %47 : vector<8x128xf32>
      %50 = vector.broadcast %cst_2 : f32 to vector<8x128xf32>
      %51 = arith.addf %49, %50 : vector<8x128xf32>
      %c7_i32 = arith.constant 7 : i32
      %c0_28 = arith.constant 0 : index
      %c0_29 = arith.constant 0 : index
      %52 = vector.load %arg1[%c0_28, %c0_29] : memref<128x128xf32, #tpu.memory_space<vmem>>, vector<128x128xf32>
      %cst_30 = arith.constant dense<0.000000e+00> : vector<8x128xf32>
      %53 = tpu.matmul %51, %52, %cst_30 {dimension_numbers = #tpu.dot_dimension_numbers<[1], [0], [0], [1], [0, 0, 1, 1], [], []>} : vector<8x128xf32>, vector<128x128xf32>, vector<8x128xf32> -> vector<8x128xf32>
      %54 = vector.broadcast %cst_1 : f32 to vector<8x128xf32>
      %55 = arith.mulf %54, %53 : vector<8x128xf32>
      %56 = vector.broadcast %cst_2 : f32 to vector<8x128xf32>
      %57 = arith.addf %55, %56 : vector<8x128xf32>
      %58 = arith.subf %57, %51 : vector<8x128xf32>
      %59 = arith.mulf %58, %58 : vector<8x128xf32>
      %60 = vector.shape_cast %59 : vector<8x128xf32> to vector<1x8x128xf32>
      %cst_31 = arith.constant dense<0.000000e+00> : vector<1xf32>
      %61 = vector.multi_reduction <add>, %60, %cst_31 [1, 2] : vector<1x8x128xf32> to vector<1xf32>
      %62 = vector.shape_cast %61 : vector<1xf32> to vector<1x1x1xf32>
      %63 = vector.extract %62[0, 0, 0] : f32 from vector<1x1x1xf32>
      %c8_i32 = arith.constant 8 : i32
      %64 = arith.addi %arg5, %c8_i32 : i32
      scf.yield %57, %63, %64 : vector<8x128xf32>, f32, i32
    }
    %2 = tpu.iota {dimensions = array<i32: 1>} : vector<1x128xi32>
    %c16_i32 = arith.constant 16 : i32
    %3 = vector.broadcast %c16_i32 : i32 to vector<1x128xi32>
    %4 = arith.cmpi slt, %2, %3 : vector<1x128xi32>
    %5 = arith.extui %4 : vector<1x128xi1> to vector<1x128xi32>
    %6 = arith.sitofp %5 : vector<1x128xi32> to vector<1x128xf32>
    %7 = vector.extract_strided_slice %1#0 {offsets = [0, 0], sizes = [1, 128], strides = [1, 1]} : vector<8x128xf32> to vector<1x128xf32>
    %8 = arith.mulf %7, %6 : vector<1x128xf32>
    %c0_4 = arith.constant 0 : index
    %c0_5 = arith.constant 0 : index
    %9 = vector.load %arg2[%c0_4, %c0_5] : memref<1x128xf32, #tpu.memory_space<vmem>>, vector<1x128xf32>
    tpu.vector_store %arg2[%c0_4, %c0_5], %8 {strides = array<i32>} : memref<1x128xf32, #tpu.memory_space<vmem>>, vector<1x128xf32>,
    return
  }
}

</mosaic_0001>

<llo_original>
// kernel: tpu_custom_call.1
$region0: #{tpu_custom_call.1}
  #allocation0 [shape = 'u32[]', space=smem, size = 0x4, offset = 0x4, fixed_abs, tag = 'smem constant byte address 0x4 - core index']
  #allocation1 [shape = 'u32[72,128]{1,0:T(1,128)}', space=vmem, size = 0x9000, scoped, tag = 'internal scratch']
  %s0 = inlined_call_operand.hbm [shape: f32[8,128], index: 0, kind: input, shape index: {}]
  %s1 = inlined_call_operand.hbm [shape: f32[128,128], index: 1, kind: input, shape index: {}]
  %s2 = inlined_call_operand.hbm [shape: f32[1,128], index: 2, kind: output, shape index: {}]
  %s3 = sld [smem:[#allocation0]]
  $region33: #{tpu_custom_call.1} parent=0
    _
  %s5 = ssub.s32 1, %s3
  %s6 = scalar_select 0, %s5, %s3
  $region1: #{tpu_custom_call.1} parent=0
    #allocation2 [shape = 'u8[4096]{0}', space=vmem, size = 0x1000, scoped, tag = 'input window, operand 0, single buffered']
    #allocation3 [shape = 's32[1]{0}', space=sflag, size = 0x4, scoped, tag = 'scoped memory for tpu_custom_call.1']
    #allocation4 [shape = 's32[1]{0}', space=sflag, size = 0x4, scoped, tag = 'scoped memory for tpu_custom_call.1']
    #allocation5 [shape = 'u8[65536]{0}', space=vmem, size = 0x10000, scoped, tag = 'input window, operand 1, single buffered']
    #allocation6 [shape = 's32[1]{0}', space=sflag, size = 0x4, scoped, tag = 'scoped memory for tpu_custom_call.1']
    #allocation7 [shape = 'u8[512]{0}', space=vmem, size = 0x400, scoped, tag = 'output window, operand 0, single buffered']
    %7 = vsyncpa [#allocation3], 0
    %8 = vsyncpa [#allocation6], 0
    %9 = vsyncpa [#allocation4], 0
    // Predicated region
    $region2: #{tpu_custom_call.1} parent=1 // pred_check
      _
    $region3: #{tpu_custom_call.1} parent=1 // pred_check_branch
      %11 = sbr.rel (0) target = $region5
    $region4: #{tpu_custom_call.1} parent=1 // pred_region
      %13 = vsyncadd [#allocation3], 0
      %s15 = sshll.u32 %s0, 4
      %s16 = int_to_ptr.hbm [resolvable:$true] %s15
      %s17 = sshll.u32 [#allocation2], 4
      %s18 = int_to_ptr.vmem [resolvable:$true] %s17
      %20 = dma.hbm_to_vmem [thread:$0]  %s16, 128, %s18, [#allocation3]
    $region5: #{tpu_custom_call.1} parent=1 // pred_fallthru
      _
    // Predicated region
    $region6: #{tpu_custom_call.1} parent=1 // pred_check
      _
    $region7: #{tpu_custom_call.1} parent=1 // pred_check_branch
      %22 = sbr.rel (0) target = $region9
    $region8: #{tpu_custom_call.1} parent=1 // pred_region
      %24 = vsyncadd [#allocation6], 0
      %s25 = sshll.u32 %s1, 4
      %s26 = int_to_ptr.hbm [resolvable:$true] %s25
      %s27 = sshll.u32 [#allocation5], 4
      %s28 = int_to_ptr.vmem [resolvable:$true] %s27
      %33 = dma.hbm_to_vmem [thread:$0]  %s26, 2048, %s28, [#allocation6], 128, 128, 8
    $region9: #{tpu_custom_call.1} parent=1 // pred_fallthru
      _
    // Predicated region
    $region10: #{tpu_custom_call.1} parent=1 // pred_check
      _
    $region11: #{tpu_custom_call.1} parent=1 // pred_check_branch
      %35 = sbr.rel (0) target = $region13
    $region12: #{tpu_custom_call.1} parent=1 // pred_region
      %37 = dma.done [#allocation3], 128
    $region13: #{tpu_custom_call.1} parent=1 // pred_fallthru
      _
    // Predicated region
    $region14: #{tpu_custom_call.1} parent=1 // pred_check
      _
    $region15: #{tpu_custom_call.1} parent=1 // pred_check_branch
      %39 = sbr.rel (0) target = $region17
    $region16: #{tpu_custom_call.1} parent=1 // pred_region
      %41 = dma.done [#allocation6], 2048
    $region17: #{tpu_custom_call.1} parent=1 // pred_fallthru
      _
    %v42 = vld [vmem:[#allocation2] sm:$0xff]
    // While loop
    $region18: #{tpu_custom_call.1} parent=1 // loop_pre_header
      _
    $region19: #{tpu_custom_call.1} parent=1 // loop_header
      %v44 = vphi %v42, %v244
      %s45 = sphi 1e+30, %s255
      %s46 = sphi 0, %s256
      %p47 = scmp.gt.f32.partialorder %s45, 8e-10
      %p48 = scmp.lt.s32.totalorder %s46, 1024
      %p49 = pnand %p47, %p48
      %p50 = pneg %p49
    $region20: #{tpu_custom_call.1} parent=1 // loop_header_branch
      %52 = sbr.rel (%p49) target = $region24
    $region21: #{tpu_custom_call.1} parent=1 // loop_body
      %v53 = vld [vmem:[#allocation5] sm:$0xff]
      %v54 = vld [vmem:[#allocation5 + $0x8] sm:$0xff]
      %v55 = vld [vmem:[#allocation5 + $0x10] sm:$0xff]
      %v56 = vld [vmem:[#allocation5 + $0x18] sm:$0xff]
      %v57 = vld [vmem:[#allocation5 + $0x20] sm:$0xff]
      %v58 = vld [vmem:[#allocation5 + $0x28] sm:$0xff]
      %v59 = vld [vmem:[#allocation5 + $0x30] sm:$0xff]
      %v60 = vld [vmem:[#allocation5 + $0x38] sm:$0xff]
      %v61 = vld [vmem:[#allocation5 + $0x40] sm:$0xff]
      %v62 = vld [vmem:[#allocation5 + $0x48] sm:$0xff]
      %v63 = vld [vmem:[#allocation5 + $0x50] sm:$0xff]
      %v64 = vld [vmem:[#allocation5 + $0x58] sm:$0xff]
      %v65 = vld [vmem:[#allocation5 + $0x60] sm:$0xff]
      %v66 = vld [vmem:[#allocation5 + $0x68] sm:$0xff]
      %v67 = vld [vmem:[#allocation5 + $0x70] sm:$0xff]
      %v68 = vld [vmem:[#allocation5 + $0x78] sm:$0xff]
      %69 = vmatpush.msra.mxu0 %v68
      %70 = vmatpush.msra.mxu0 %v67
      %71 = vmatpush.msra.mxu0 %v66
      %72 = vmatpush.msra.mxu0 %v65
      %73 = vmatpush.msra.mxu0 %v64
      %74 = vmatpush.msra.mxu0 %v63
      %75 = vmatpush.msra.mxu0 %v62
      %76 = vmatpush.msra.mxu0 %v61
      %77 = vmatpush.msra.mxu0 %v60
      %78 = vmatpush.msra.mxu0 %v59
      %79 = vmatpush.msra.mxu0 %v58
      %80 = vmatpush.msra.mxu0 %v57
      %81 = vmatpush.msra.mxu0 %v56
      %82 = vmatpush.msra.mxu0 %v55
      %83 = vmatpush.msra.mxu0 %v54
      %84 = vmatpush.msra.mxu0 %v53
      %85 = vmatmul.f32.gmra.mxu0 %v44
      %v86 = vpop.f32.mrf.mxu0
      %v87 = vadd.f32 0.0, %v86
      %88 = vdwg.mxu0
      %v89 = vmul.f32 %v87, 0.9
      %v90 = vadd.f32 %v89, 0.00625
      %91 = vmatpush.msra.mxu0 %v68
      %92 = vmatpush.msra.mxu0 %v67
      %93 = vmatpush.msra.mxu0 %v66
      %94 = vmatpush.msra.mxu0 %v65
      %95 = vmatpush.msra.mxu0 %v64
      %96 = vmatpush.msra.mxu0 %v63
      %97 = vmatpush.msra.mxu0 %v62
      %98 = vmatpush.msra.mxu0 %v61
      %99 = vmatpush.msra.mxu0 %v60
      %100 = vmatpush.msra.mxu0 %v59
      %101 = vmatpush.msra.mxu0 %v58
      %102 = vmatpush.msra.mxu0 %v57
      %103 = vmatpush.msra.mxu0 %v56
      %104 = vmatpush.msra.mxu0 %v55
      %105 = vmatpush.msra.mxu0 %v54
      %106 = vmatpush.msra.mxu0 %v53
      %107 = vmatmul.f32.gmra.mxu0 %v90
      %v108 = vpop.f32.mrf.mxu0
      %v109 = vadd.f32 0.0, %v108
      %110 = vdwg.mxu0
      %v111 = vmul.f32 %v109, 0.9
      %v112 = vadd.f32 %v111, 0.00625
      %113 = vmatpush.msra.mxu0 %v68
      %114 = vmatpush.msra.mxu0 %v67
      %115 = vmatpush.msra.mxu0 %v66
      %116 = vmatpush.msra.mxu0 %v65
      %117 = vmatpush.msra.mxu0 %v64
      %118 = vmatpush.msra.mxu0 %v63
      %119 = vmatpush.msra.mxu0 %v62
      %120 = vmatpush.msra.mxu0 %v61
      %121 = vmatpush.msra.mxu0 %v60
      %122 = vmatpush.msra.mxu0 %v59
      %123 = vmatpush.msra.mxu0 %v58
      %124 = vmatpush.msra.mxu0 %v57
      %125 = vmatpush.msra.mxu0 %v56
      %126 = vmatpush.msra.mxu0 %v55
      %127 = vmatpush.msra.mxu0 %v54
      %128 = vmatpush.msra.mxu0 %v53
      %129 = vmatmul.f32.gmra.mxu0 %v112
      %v130 = vpop.f32.mrf.mxu0
      %v131 = vadd.f32 0.0, %v130
      %132 = vdwg.mxu0
      %v133 = vmul.f32 %v131, 0.9
      %v134 = vadd.f32 %v133, 0.00625
      %135 = vmatpush.msra.mxu0 %v68
      %136 = vmatpush.msra.mxu0 %v67
      %137 = vmatpush.msra.mxu0 %v66
      %138 = vmatpush.msra.mxu0 %v65
      %139 = vmatpush.msra.mxu0 %v64
      %140 = vmatpush.msra.mxu0 %v63
      %141 = vmatpush.msra.mxu0 %v62
      %142 = vmatpush.msra.mxu0 %v61
      %143 = vmatpush.msra.mxu0 %v60
      %144 = vmatpush.msra.mxu0 %v59
      %145 = vmatpush.msra.mxu0 %v58
      %146 = vmatpush.msra.mxu0 %v57
      %147 = vmatpush.msra.mxu0 %v56
      %148 = vmatpush.msra.mxu0 %v55
      %149 = vmatpush.msra.mxu0 %v54
      %150 = vmatpush.msra.mxu0 %v53
      %151 = vmatmul.f32.gmra.mxu0 %v134
      %v152 = vpop.f32.mrf.mxu0
      %v153 = vadd.f32 0.0, %v152
      %154 = vdwg.mxu0
      %v155 = vmul.f32 %v153, 0.9
      %v156 = vadd.f32 %v155, 0.00625
      %157 = vmatpush.msra.mxu0 %v68
      %158 = vmatpush.msra.mxu0 %v67
      %159 = vmatpush.msra.mxu0 %v66
      %160 = vmatpush.msra.mxu0 %v65
      %161 = vmatpush.msra.mxu0 %v64
      %162 = vmatpush.msra.mxu0 %v63
      %163 = vmatpush.msra.mxu0 %v62
      %164 = vmatpush.msra.mxu0 %v61
      %165 = vmatpush.msra.mxu0 %v60
      %166 = vmatpush.msra.mxu0 %v59
      %167 = vmatpush.msra.mxu0 %v58
      %168 = vmatpush.msra.mxu0 %v57
      %169 = vmatpush.msra.mxu0 %v56
      %170 = vmatpush.msra.mxu0 %v55
      %171 = vmatpush.msra.mxu0 %v54
      %172 = vmatpush.msra.mxu0 %v53
      %173 = vmatmul.f32.gmra.mxu0 %v156
      %v174 = vpop.f32.mrf.mxu0
      %v175 = vadd.f32 0.0, %v174
      %176 = vdwg.mxu0
      %v177 = vmul.f32 %v175, 0.9
      %v178 = vadd.f32 %v177, 0.00625
      %179 = vmatpush.msra.mxu0 %v68
      %180 = vmatpush.msra.mxu0 %v67
      %181 = vmatpush.msra.mxu0 %v66
      %182 = vmatpush.msra.mxu0 %v65
      %183 = vmatpush.msra.mxu0 %v64
      %184 = vmatpush.msra.mxu0 %v63
      %185 = vmatpush.msra.mxu0 %v62
      %186 = vmatpush.msra.mxu0 %v61
      %187 = vmatpush.msra.mxu0 %v60
      %188 = vmatpush.msra.mxu0 %v59
      %189 = vmatpush.msra.mxu0 %v58
      %190 = vmatpush.msra.mxu0 %v57
      %191 = vmatpush.msra.mxu0 %v56
      %192 = vmatpush.msra.mxu0 %v55
      %193 = vmatpush.msra.mxu0 %v54
      %194 = vmatpush.msra.mxu0 %v53
      %195 = vmatmul.f32.gmra.mxu0 %v178
      %v196 = vpop.f32.mrf.mxu0
      %v197 = vadd.f32 0.0, %v196
      %198 = vdwg.mxu0
      %v199 = vmul.f32 %v197, 0.9
      %v200 = vadd.f32 %v199, 0.00625
      %201 = vmatpush.msra.mxu0 %v68
      %202 = vmatpush.msra.mxu0 %v67
      %203 = vmatpush.msra.mxu0 %v66
      %204 = vmatpush.msra.mxu0 %v65
      %205 = vmatpush.msra.mxu0 %v64
      %206 = vmatpush.msra.mxu0 %v63
      %207 = vmatpush.msra.mxu0 %v62
      %208 = vmatpush.msra.mxu0 %v61
      %209 = vmatpush.msra.mxu0 %v60
      %210 = vmatpush.msra.mxu0 %v59
      %211 = vmatpush.msra.mxu0 %v58
      %212 = vmatpush.msra.mxu0 %v57
      %213 = vmatpush.msra.mxu0 %v56
      %214 = vmatpush.msra.mxu0 %v55
      %215 = vmatpush.msra.mxu0 %v54
      %216 = vmatpush.msra.mxu0 %v53
      %217 = vmatmul.f32.gmra.mxu0 %v200
      %v218 = vpop.f32.mrf.mxu0
      %v219 = vadd.f32 0.0, %v218
      %220 = vdwg.mxu0
      %v221 = vmul.f32 %v219, 0.9
      %v222 = vadd.f32 %v221, 0.00625
      %223 = vmatpush.msra.mxu0 %v68
      %224 = vmatpush.msra.mxu0 %v67
      %225 = vmatpush.msra.mxu0 %v66
      %226 = vmatpush.msra.mxu0 %v65
      %227 = vmatpush.msra.mxu0 %v64
      %228 = vmatpush.msra.mxu0 %v63
      %229 = vmatpush.msra.mxu0 %v62
      %230 = vmatpush.msra.mxu0 %v61
      %231 = vmatpush.msra.mxu0 %v60
      %232 = vmatpush.msra.mxu0 %v59
      %233 = vmatpush.msra.mxu0 %v58
      %234 = vmatpush.msra.mxu0 %v57
      %235 = vmatpush.msra.mxu0 %v56
      %236 = vmatpush.msra.mxu0 %v55
      %237 = vmatpush.msra.mxu0 %v54
      %238 = vmatpush.msra.mxu0 %v53
      %239 = vmatmul.f32.gmra.mxu0 %v222
      %v240 = vpop.f32.mrf.mxu0
      %v241 = vadd.f32 0.0, %v240
      %242 = vdwg.mxu0
      %v243 = vmul.f32 %v241, 0.9
      %v244 = vadd.f32 %v243, 0.00625
      %v245 = vsub.f32 %v244, %v222
      %v246 = vmul.f32 %v245, %v245
      %247 = vadd.xlane.f32.xlu0 %v246
      %v248 = vpop.xlane.xlu0 %247
      %v249 = vrot.slane %v248, 4
      %v250 = vadd.f32 %v248, %v249
      %v251 = vrot.slane %v250, 2
      %v252 = vadd.f32 %v250, %v251
      %v253 = vrot.slane %v252, 1
      %v254 = vadd.f32 %v252, %v253
      %s255 = vtos %v254
      %s256 = sadd.s32 %s46, 8
    $region22: #{tpu_custom_call.1} parent=1 // loop_footer
      _
    $region23: #{tpu_custom_call.1} parent=1 // loop_footer_branch
      %43 = sbr.rel target = $region19
    $region24: #{tpu_custom_call.1} parent=1 // loop_exit
      _
    %v257 = vlaneseq
    %v258 = vand.u32 %v257, 127
    %vm259 = vcmp.lt.s32.totalorder %v258, 16
    %v260 = vsel %vm259, 1, 0
    %v261 = vcvt.s32.f32 %v260
    %v262 = vmul.f32 %v44, %v261
    %263 = vst [vmem:[#allocation7] sm:$0x1] %v262
    // Predicated region
    $region25: #{tpu_custom_call.1} parent=1 // pred_check
      _
    $region26: #{tpu_custom_call.1} parent=1 // pred_check_branch
      %265 = sbr.rel (0) target = $region28
    $region27: #{tpu_custom_call.1} parent=1 // pred_region
      %267 = vsyncadd [#allocation4], 0
      %s269 = sshll.u32 [#allocation7], 4
      %s270 = int_to_ptr.vmem [resolvable:$true] %s269
      %s271 = sshll.u32 %s2, 4
      %s272 = int_to_ptr.hbm [resolvable:$true] %s271
      %274 = dma.vmem_to_hbm [thread:$0]  %s270, 16, %s272, [#allocation4]
    $region28: #{tpu_custom_call.1} parent=1 // pred_fallthru
      _
    // Predicated region
    $region29: #{tpu_custom_call.1} parent=1 // pred_check
      _
    $region30: #{tpu_custom_call.1} parent=1 // pred_check_branch
      %276 = sbr.rel (0) target = $region32
    $region31: #{tpu_custom_call.1} parent=1 // pred_region
      %278 = dma.done [#allocation4], 16
    $region32: #{tpu_custom_call.1} parent=1 // pred_fallthru
      _
    %279 = vsyncpa [#allocation3], 1
    %280 = vsyncpa [#allocation6], 1
    %281 = vsyncpa [#allocation4], 1

</llo_original>
